<compile_context>
chip_gen: v7x
topology: tpu7x:2x2x1
jax: 0.10.0
libtpu: 0.0.40
codegen_flags: <defaults>
</compile_context>

<pallas_src>
import math
import numpy as np

import jax
import jax.numpy as jnp
from jax.experimental import pallas as pl
from jax.experimental.pallas import tpu as pltpu

_SQRT1_2 = 0.7071067811865476


def _erf_approx(z):
    """Abramowitz & Stegun 7.1.26 erf approximation, |error| <= 1.5e-7.

    Uses abs/mul/add/exp plus an approximate (EUP) reciprocal, all of which
    lower cleanly in Mosaic (exact lax.erf has no guaranteed Pallas-TPU
    lowering).
    """
    az = jnp.abs(z)
    # approx reciprocal runs on the EUP slot (otherwise idle except for exp),
    # freeing VALU bundles vs a full-precision divide.
    t = pl.reciprocal(1.0 + 0.3275911 * az, approx=True)
    poly = t * (0.254829592
                + t * (-0.284496736
                       + t * (1.421413741
                              + t * (-1.453152027 + t * 1.061405429))))
    y = 1.0 - poly * jnp.exp(-az * az)
    return jnp.where(z < 0.0, -y, y)


def _gelu_exact(h):
    # erf-based GELU, matching torch.nn.GELU() (approximate='none').
    return 0.5 * h * (1.0 + _erf_approx(h * _SQRT1_2))


def _fused_time_kernel(x_ref, freq_ref, mask_ref,
                       w1_ref, b1_ref, w2_ref, b2_ref, wp_ref, bp_ref,
                       t_out_ref, proj_out_ref):
    # x_ref:       (B, 1)      f32 timesteps
    # freq_ref:    (1, dim)    [freqs, freqs]                (host-precomputed)
    # mask_ref:    (1, dim)    1.0 on the sin half, 0.0 on the cos half
    # w1_ref:      (dim, td)   bf16, first time-MLP Linear (laid out for emb @ W)
    # b1_ref:      (1, td)     f32
    # w2_ref:      (td, td)    bf16, second time-MLP Linear
    # b2_ref:      (1, td)     f32
    # wp_ref:      (td, P)     bf16, all ResnetBlock scale/shift Linears stacked
    # bp_ref:      (1, P)      f32
    # t_out_ref:   (B, td)     f32  time embedding  (Unet1D's `t`)
    # proj_out_ref:(B, P)      f32  stacked per-block [scale | shift] rows
    z = x_ref[...] * freq_ref[...]                              # (B, dim)
    m = mask_ref[...]
    emb = m * jnp.sin(z) + (1.0 - m) * jnp.cos(z)               # exact sin|cos split

    # Linear -> GELU -> Linear  (bf16 operands, f32 accumulation on the MXU).
    h = jnp.dot(emb.astype(jnp.bfloat16), w1_ref[...],
                preferred_element_type=jnp.float32) + b1_ref[...]
    h = _gelu_exact(h)
    t_emb = jnp.dot(h.astype(jnp.bfloat16), w2_ref[...],
                    preferred_element_type=jnp.float32) + b2_ref[...]
    t_out_ref[...] = t_emb

    # Fused per-ResnetBlock mlp: SiLU(t) @ W_stacked + b_stacked.
    s = t_emb * (1.0 / (1.0 + jnp.exp(-t_emb)))                 # exact SiLU
    proj_out_ref[...] = jnp.dot(s.astype(jnp.bfloat16), wp_ref[...],
                                preferred_element_type=jnp.float32) + bp_ref[...]


def _fused_time_call(t, freq_row, mask_row, w1, b1, w2, b2, wp, bp):
    b = t.shape[0]
    dim = freq_row.shape[1]
    td = w1.shape[1]
    p = wp.shape[1]

    cost = pl.CostEstimate(
        flops=2 * b * dim * td + 2 * b * td * td + 2 * b * td * p,
        transcendentals=2 * b * dim + 2 * b * td,
        bytes_accessed=(4 * (b + 2 * dim)                       # x, freq, mask
                        + 2 * (dim * td + td * td + td * p)     # bf16 weights
                        + 4 * (2 * td + p)                      # f32 biases
                        + 4 * (b * td + b * p)))                # f32 outputs

    # Single block, no grid: largest operand is the stacked bf16 projection
    # weight (td * P * 2 bytes, well under 1 MiB at demo sizes), so everything
    # sits in VMEM and grid/pipeline scaffolding is dropped.  Blocks equal full
    # array shapes -> (8,128) rule satisfied.  Both outputs are lane-dense.
    return pl.pallas_call(
        _fused_time_kernel,
        out_shape=(jax.ShapeDtypeStruct((b, td), jnp.float32),
                   jax.ShapeDtypeStruct((b, p), jnp.float32)),
        in_specs=[pl.BlockSpec(memory_space=pltpu.VMEM)] * 9,
        out_specs=(pl.BlockSpec(memory_space=pltpu.VMEM),
                   pl.BlockSpec(memory_space=pltpu.VMEM)),
        cost_estimate=cost,
    )(t.astype(jnp.float32).reshape(b, 1),
      freq_row, mask_row, w1, b1, w2, b2, wp, bp)


# jit so the (trivial) reshape/cast of `t` folds in and per-step dispatch is a
# single cached executable; all other args are pre-converted device constants.
fused_time_embed = jax.jit(_fused_time_call)


def prepare_time_params(w1, b1, w2, b2, wp, bp, *, dim):
    """One-time host-side prep: bake constants, cast weights to bf16.

    Everything returned lives on device; nothing here runs on the per-step path.
    """
    assert dim % 2 == 0 and dim >= 4, "dim must be even and >= 4"
    half = dim // 2
    scale = math.log(10000.0) / (half - 1)
    freqs = np.exp(np.arange(half, dtype=np.float64) * -scale)
    freq_row = np.tile(freqs, 2).reshape(1, dim).astype(np.float32)
    mask_row = np.concatenate([np.ones(half), np.zeros(half)]
                              ).reshape(1, dim).astype(np.float32)
    td = w1.shape[1]
    assert w1.shape == (dim, td) and w2.shape == (td, td)
    assert wp.shape[0] == td
    return dict(
        freq_row=jnp.asarray(freq_row),
        mask_row=jnp.asarray(mask_row),
        w1=jnp.asarray(w1, jnp.bfloat16),
        b1=jnp.asarray(b1, jnp.float32).reshape(1, td),
        w2=jnp.asarray(w2, jnp.bfloat16),
        b2=jnp.asarray(b2, jnp.float32).reshape(1, td),
        wp=jnp.asarray(wp, jnp.bfloat16),
        bp=jnp.asarray(bp, jnp.float32).reshape(1, -1),
    )


def unet1d_time_proj_dims(dim, init_dim=None, dim_mults=(1, 2, 4, 8)):
    """dim_out of every ResnetBlock that consumes the time embedding, in
    Unet1D forward order (downs, mid, ups, final). Each contributes a
    Linear(time_dim, 2*dim_out); stacking their weights column-wise gives the
    (time_dim, P) matrix consumed by the fused kernel."""
    init_dim = init_dim or dim
    dims = [init_dim] + [dim * m for m in dim_mults]
    in_out = list(zip(dims[:-1], dims[1:]))
    outs = []
    for (din, _dout) in in_out:            # downs: 2 x ResnetBlock(din, din)
        outs += [din, din]
    mid = dims[-1]
    outs += [mid, mid]                     # mid_block1 / mid_block2
    for (_din, dout) in reversed(in_out):  # ups: 2 x ResnetBlock(dout+din, dout)
        outs += [dout, dout]
    outs += [init_dim]                     # final_res_block
    return outs


def _reference(t, w1, b1, w2, b2, wp, bp, *, dim):
    """Pure-JAX f32/HIGHEST mirror of the PyTorch forward (time path)."""
    half = dim // 2
    scale = math.log(10000.0) / (half - 1)
    freqs = jnp.exp(jnp.arange(half, dtype=jnp.float32) * -scale)
    z = t.astype(jnp.float32)[:, None] * freqs[None, :]
    emb = jnp.concatenate([jnp.sin(z), jnp.cos(z)], axis=-1)
    h = jnp.dot(emb, w1, precision=jax.lax.Precision.HIGHEST) + b1[None, :]
    h = jax.nn.gelu(h, approximate=False)           # exact erf GELU == nn.GELU()
    t_emb = jnp.dot(h, w2, precision=jax.lax.Precision.HIGHEST) + b2[None, :]
    s = jax.nn.silu(t_emb)
    proj = jnp.dot(s, wp, precision=jax.lax.Precision.HIGHEST) + bp[None, :]
    return t_emb, proj


if __name__ == "__main__":
    B = 8                      # batch of diffusion timesteps
    DIM = 32                   # Unet1D(dim=32)  -> SinusoidalPosEmb(32)
    TIME_DIM = 4 * DIM         # 128
    DIM_MULTS = (1, 2)         # scaled-down Unet1D config for the demo

    proj_dims = unet1d_time_proj_dims(DIM, dim_mults=DIM_MULTS)
    P = 2 * sum(proj_dims)     # stacked [scale | shift] width across all blocks

    key = jax.random.PRNGKey(0)
    kt, k1, k2, k3, k4, k5, k6 = jax.random.split(key, 7)
    t = jax.random.uniform(kt, (B,), dtype=jnp.float32) * 1000.0     # timesteps
    w1 = jax.random.normal(k1, (DIM, TIME_DIM), dtype=jnp.float32) * 0.1
    b1 = jax.random.normal(k2, (TIME_DIM,), dtype=jnp.float32) * 0.1
    w2 = jax.random.normal(k3, (TIME_DIM, TIME_DIM), dtype=jnp.float32) * 0.1
    b2 = jax.random.normal(k4, (TIME_DIM,), dtype=jnp.float32) * 0.1
    # Columns [off : off + 2*proj_dims[i]] belong to ResnetBlock i's mlp Linear.
    wp = jax.random.normal(k5, (TIME_DIM, P), dtype=jnp.float32) * 0.1
    bp = jax.random.normal(k6, (P,), dtype=jnp.float32) * 0.1

    params = prepare_time_params(w1, b1, w2, b2, wp, bp, dim=DIM)  # one-time
    t_emb, proj = fused_time_embed(t, **params)                    # per-step call
    jax.block_until_ready((t_emb, proj))

    ref_t, ref_p = _reference(t, w1, b1, w2, b2, wp, bp, dim=DIM)
    assert t_emb.shape == (B, TIME_DIM) and t_emb.dtype == jnp.float32
    assert proj.shape == (B, P) and proj.dtype == jnp.float32
    err_t = float(jnp.max(jnp.abs(t_emb - ref_t)))
    err_p = float(jnp.max(jnp.abs(proj - ref_p)))
    # bf16-MXU single-pass tolerance (documented): ~1e-2 abs on O(0.1) outputs.
    assert err_t < 1e-2, err_t
    assert err_p < 1e-2, err_p
    print("KERNEL_OK")
</pallas_src>

<mosaic_0001>
module attributes {stable_mosaic.version = 11 : i64} {
  func.func @_fused_time_kernel(%arg0: memref<8x1xf32, #tpu.memory_space<vmem>>, %arg1: memref<1x32xf32, #tpu.memory_space<vmem>>, %arg2: memref<1x32xf32, #tpu.memory_space<vmem>>, %arg3: memref<32x128xbf16, #tpu.memory_space<vmem>>, %arg4: memref<1x128xf32, #tpu.memory_space<vmem>>, %arg5: memref<128x128xbf16, #tpu.memory_space<vmem>>, %arg6: memref<1x128xf32, #tpu.memory_space<vmem>>, %arg7: memref<128x960xbf16, #tpu.memory_space<vmem>>, %arg8: memref<1x960xf32, #tpu.memory_space<vmem>>, %arg9: memref<8x128xf32, #tpu.memory_space<vmem>>, %arg10: memref<8x960xf32, #tpu.memory_space<vmem>>) attributes {dimension_semantics = [], scalar_prefetch = 0 : i64, scratch_operands = 0 : i64, tpu.core_type = #tpu.core_type<tc>} {
    %c0 = arith.constant 0 : index
    %c0_0 = arith.constant 0 : index
    %0 = vector.load %arg0[%c0, %c0_0] : memref<8x1xf32, #tpu.memory_space<vmem>>, vector<8x1xf32>
    %c0_1 = arith.constant 0 : index
    %c0_2 = arith.constant 0 : index
    %1 = vector.load %arg1[%c0_1, %c0_2] : memref<1x32xf32, #tpu.memory_space<vmem>>, vector<1x32xf32>
    %2 = vector.broadcast %0 : vector<8x1xf32> to vector<8x32xf32>
    %3 = vector.broadcast %1 : vector<1x32xf32> to vector<8x32xf32>
    %4 = arith.mulf %2, %3 : vector<8x32xf32>
    %c0_3 = arith.constant 0 : index
    %c0_4 = arith.constant 0 : index
    %5 = vector.load %arg2[%c0_3, %c0_4] : memref<1x32xf32, #tpu.memory_space<vmem>>, vector<1x32xf32>
    %6 = math.sin %4 : vector<8x32xf32>
    %7 = vector.broadcast %5 : vector<1x32xf32> to vector<8x32xf32>
    %8 = arith.mulf %7, %6 : vector<8x32xf32>
    %cst = arith.constant 1.000000e+00 : f32
    %9 = vector.broadcast %cst : f32 to vector<1x32xf32>
    %10 = arith.subf %9, %5 : vector<1x32xf32>
    %11 = math.cos %4 : vector<8x32xf32>
    %12 = vector.broadcast %10 : vector<1x32xf32> to vector<8x32xf32>
    %13 = arith.mulf %12, %11 : vector<8x32xf32>
    %14 = arith.addf %8, %13 : vector<8x32xf32>
    %15 = arith.truncf %14 : vector<8x32xf32> to vector<8x32xbf16>
    %c0_5 = arith.constant 0 : index
    %c0_6 = arith.constant 0 : index
    %16 = vector.load %arg3[%c0_5, %c0_6] : memref<32x128xbf16, #tpu.memory_space<vmem>>, vector<32x128xbf16>
    %cst_7 = arith.constant dense<0.000000e+00> : vector<8x128xf32>
    %17 = tpu.matmul %15, %16, %cst_7 {dimension_numbers = #tpu.dot_dimension_numbers<[1], [0], [0], [1], [0, 0, 1, 1], [], []>} : vector<8x32xbf16>, vector<32x128xbf16>, vector<8x128xf32> -> vector<8x128xf32>
    %c0_8 = arith.constant 0 : index
    %c0_9 = arith.constant 0 : index
    %18 = vector.load %arg4[%c0_8, %c0_9] : memref<1x128xf32, #tpu.memory_space<vmem>>, vector<1x128xf32>
    %19 = vector.broadcast %18 : vector<1x128xf32> to vector<8x128xf32>
    %20 = arith.addf %17, %19 : vector<8x128xf32>
    %cst_10 = arith.constant 5.000000e-01 : f32
    %21 = vector.broadcast %cst_10 : f32 to vector<8x128xf32>
    %22 = arith.mulf %21, %20 : vector<8x128xf32>
    %cst_11 = arith.constant 0.707106769 : f32
    %23 = vector.broadcast %cst_11 : f32 to vector<8x128xf32>
    %24 = arith.mulf %20, %23 : vector<8x128xf32>
    %25 = math.absf %24 : vector<8x128xf32>
    %cst_12 = arith.constant 0.327591091 : f32
    %26 = vector.broadcast %cst_12 : f32 to vector<8x128xf32>
    %27 = arith.mulf %26, %25 : vector<8x128xf32>
    %cst_13 = arith.constant 1.000000e+00 : f32
    %28 = vector.broadcast %cst_13 : f32 to vector<8x128xf32>
    %29 = arith.addf %28, %27 : vector<8x128xf32>
    %30 = tpu.reciprocal %29 {approx = true} : vector<8x128xf32> -> vector<8x128xf32>
    %cst_14 = arith.constant 1.06140542 : f32
    %31 = vector.broadcast %cst_14 : f32 to vector<8x128xf32>
    %32 = arith.mulf %30, %31 : vector<8x128xf32>
    %cst_15 = arith.constant -1.45315206 : f32
    %33 = vector.broadcast %cst_15 : f32 to vector<8x128xf32>
    %34 = arith.addf %33, %32 : vector<8x128xf32>
    %35 = arith.mulf %30, %34 : vector<8x128xf32>
    %cst_16 = arith.constant 1.42141378 : f32
    %36 = vector.broadcast %cst_16 : f32 to vector<8x128xf32>
    %37 = arith.addf %36, %35 : vector<8x128xf32>
    %38 = arith.mulf %30, %37 : vector<8x128xf32>
    %cst_17 = arith.constant -0.284496725 : f32
    %39 = vector.broadcast %cst_17 : f32 to vector<8x128xf32>
    %40 = arith.addf %39, %38 : vector<8x128xf32>
    %41 = arith.mulf %30, %40 : vector<8x128xf32>
    %cst_18 = arith.constant 0.254829586 : f32
    %42 = vector.broadcast %cst_18 : f32 to vector<8x128xf32>
    %43 = arith.addf %42, %41 : vector<8x128xf32>
    %44 = arith.mulf %30, %43 : vector<8x128xf32>
    %cst_19 = arith.constant 0.000000e+00 : f32
    %45 = vector.broadcast %cst_19 : f32 to vector<8x128xf32>
    %46 = arith.subf %45, %25 : vector<8x128xf32>
    %47 = arith.mulf %46, %25 : vector<8x128xf32>
    %48 = math.exp %47 : vector<8x128xf32>
    %49 = arith.mulf %44, %48 : vector<8x128xf32>
    %cst_20 = arith.constant 1.000000e+00 : f32
    %50 = vector.broadcast %cst_20 : f32 to vector<8x128xf32>
    %51 = arith.subf %50, %49 : vector<8x128xf32>
    %cst_21 = arith.constant 0.000000e+00 : f32
    %52 = vector.broadcast %cst_21 : f32 to vector<8x128xf32>
    %53 = arith.cmpf olt, %24, %52 : vector<8x128xf32>
    %cst_22 = arith.constant 0.000000e+00 : f32
    %54 = vector.broadcast %cst_22 : f32 to vector<8x128xf32>
    %55 = arith.subf %54, %51 : vector<8x128xf32>
    %56 = arith.select %53, %55, %51 : vector<8x128xi1>, vector<8x128xf32>
    %cst_23 = arith.constant 1.000000e+00 : f32
    %57 = vector.broadcast %cst_23 : f32 to vector<8x128xf32>
    %58 = arith.addf %57, %56 : vector<8x128xf32>
    %59 = arith.mulf %22, %58 : vector<8x128xf32>
    %60 = arith.truncf %59 : vector<8x128xf32> to vector<8x128xbf16>
    %c0_24 = arith.constant 0 : index
    %c0_25 = arith.constant 0 : index
    %61 = vector.load %arg5[%c0_24, %c0_25] : memref<128x128xbf16, #tpu.memory_space<vmem>>, vector<128x128xbf16>
    %cst_26 = arith.constant dense<0.000000e+00> : vector<8x128xf32>
    %62 = tpu.matmul %60, %61, %cst_26 {dimension_numbers = #tpu.dot_dimension_numbers<[1], [0], [0], [1], [0, 0, 1, 1], [], []>} : vector<8x128xbf16>, vector<128x128xbf16>, vector<8x128xf32> -> vector<8x128xf32>
    %c0_27 = arith.constant 0 : index
    %c0_28 = arith.constant 0 : index
    %63 = vector.load %arg6[%c0_27, %c0_28] : memref<1x128xf32, #tpu.memory_space<vmem>>, vector<1x128xf32>
    %64 = vector.broadcast %63 : vector<1x128xf32> to vector<8x128xf32>
    %65 = arith.addf %62, %64 : vector<8x128xf32>
    %c0_29 = arith.constant 0 : index
    %c0_30 = arith.constant 0 : index
    %66 = vector.load %arg9[%c0_29, %c0_30] : memref<8x128xf32, #tpu.memory_space<vmem>>, vector<8x128xf32>
    tpu.vector_store %arg9[%c0_29, %c0_30], %65 {strides = array<i32>} : memref<8x128xf32, #tpu.memory_space<vmem>>, vector<8x128xf32>,
    %cst_31 = arith.constant 0.000000e+00 : f32
    %67 = vector.broadcast %cst_31 : f32 to vector<8x128xf32>
    %68 = arith.subf %67, %65 : vector<8x128xf32>
    %69 = math.exp %68 : vector<8x128xf32>
    %cst_32 = arith.constant 1.000000e+00 : f32
    %70 = vector.broadcast %cst_32 : f32 to vector<8x128xf32>
    %71 = arith.addf %70, %69 : vector<8x128xf32>
    %cst_33 = arith.constant 1.000000e+00 : f32
    %72 = vector.broadcast %cst_33 : f32 to vector<8x128xf32>
    %73 = arith.divf %72, %71 : vector<8x128xf32>
    %74 = arith.mulf %65, %73 : vector<8x128xf32>
    %75 = arith.truncf %74 : vector<8x128xf32> to vector<8x128xbf16>
    %c0_34 = arith.constant 0 : index
    %c0_35 = arith.constant 0 : index
    %76 = vector.load %arg7[%c0_34, %c0_35] : memref<128x960xbf16, #tpu.memory_space<vmem>>, vector<128x960xbf16>
    %cst_36 = arith.constant dense<0.000000e+00> : vector<8x960xf32>
    %77 = tpu.matmul %75, %76, %cst_36 {dimension_numbers = #tpu.dot_dimension_numbers<[1], [0], [0], [1], [0, 0, 1, 1], [], []>} : vector<8x128xbf16>, vector<128x960xbf16>, vector<8x960xf32> -> vector<8x960xf32>
    %c0_37 = arith.constant 0 : index
    %c0_38 = arith.constant 0 : index
    %78 = vector.load %arg8[%c0_37, %c0_38] : memref<1x960xf32, #tpu.memory_space<vmem>>, vector<1x960xf32>
    %79 = vector.broadcast %78 : vector<1x960xf32> to vector<8x960xf32>
    %80 = arith.addf %77, %79 : vector<8x960xf32>
    %c0_39 = arith.constant 0 : index
    %c0_40 = arith.constant 0 : index
    %81 = vector.load %arg10[%c0_39, %c0_40] : memref<8x960xf32, #tpu.memory_space<vmem>>, vector<8x960xf32>
    tpu.vector_store %arg10[%c0_39, %c0_40], %80 {strides = array<i32>} : memref<8x960xf32, #tpu.memory_space<vmem>>, vector<8x960xf32>,
    return
  }
}

</mosaic_0001>

<llo_original>
// kernel: _fused_time_call.1
$region0: #{_fused_time_call.1}
  #allocation0 [shape = 'u32[]', space=smem, size = 0x4, offset = 0x4, fixed_abs, tag = 'smem constant byte address 0x4 - core index']
  #allocation1 [shape = 'u32[144,128]{1,0:T(1,128)}', space=vmem, size = 0x12000, scoped, tag = 'internal scratch']
  %s0 = inlined_call_operand.vmem [shape: f32[8,1], index: 0, kind: input, shape index: {}]
  %s1 = inlined_call_operand.vmem [shape: f32[1,32], index: 1, kind: input, shape index: {}]
  %s2 = inlined_call_operand.vmem [shape: f32[1,32], index: 2, kind: input, shape index: {}]
  %s3 = inlined_call_operand.vmem [shape: bf16[32,128], index: 3, kind: input, shape index: {}]
  %s4 = inlined_call_operand.vmem [shape: f32[1,128], index: 4, kind: input, shape index: {}]
  %s5 = inlined_call_operand.vmem [shape: bf16[128,128], index: 5, kind: input, shape index: {}]
  %s6 = inlined_call_operand.vmem [shape: f32[1,128], index: 6, kind: input, shape index: {}]
  %s7 = inlined_call_operand.vmem [shape: bf16[128,960], index: 7, kind: input, shape index: {}]
  %s8 = inlined_call_operand.vmem [shape: f32[1,960], index: 8, kind: input, shape index: {}]
  %s9 = inlined_call_operand.hbm [shape: f32[8,128], index: 9, kind: output, shape index: {0}]
  %s10 = inlined_call_operand.hbm [shape: f32[8,960], index: 10, kind: output, shape index: {1}]
  %11 = xla_tuple %s9, %s10
  %s12 = sld [smem:[#allocation0]]
  $region54: #{_fused_time_call.1} parent=0
    _
  %s14 = ssub.s32 1, %s12
  %s15 = scalar_select 0, %s14, %s12
  $region1: #{_fused_time_call.1} parent=0
    #allocation2 [shape = 'u8[4096]{0}', space=vmem, size = 0x1000, scoped, tag = 'output window, operand 0, single buffered']
    #allocation3 [shape = 's32[1]{0}', space=sflag, size = 0x4, scoped, tag = 'scoped memory for _fused_time_call.1']
    #allocation4 [shape = 'u8[32768]{0}', space=vmem, size = 0x8000, scoped, tag = 'output window, operand 1, single buffered']
    #allocation5 [shape = 's32[1]{0}', space=sflag, size = 0x4, scoped, tag = 'scoped memory for _fused_time_call.1']
    %16 = vsyncpa [#allocation3], 0
    %17 = vsyncpa [#allocation5], 0
    // Predicated region
    $region2: #{_fused_time_call.1} parent=1 // pred_check
      _
    $region3: #{_fused_time_call.1} parent=1 // pred_check_branch
      %19 = sbr.rel (0) target = $region5
    $region4: #{_fused_time_call.1} parent=1 // pred_region
      _
    $region5: #{_fused_time_call.1} parent=1 // pred_fallthru
      _
    // Predicated region
    $region6: #{_fused_time_call.1} parent=1 // pred_check
      _
    $region7: #{_fused_time_call.1} parent=1 // pred_check_branch
      %21 = sbr.rel (0) target = $region9
    $region8: #{_fused_time_call.1} parent=1 // pred_region
      _
    $region9: #{_fused_time_call.1} parent=1 // pred_fallthru
      _
    // Predicated region
    $region10: #{_fused_time_call.1} parent=1 // pred_check
      _
    $region11: #{_fused_time_call.1} parent=1 // pred_check_branch
      %23 = sbr.rel (0) target = $region13
    $region12: #{_fused_time_call.1} parent=1 // pred_region
      _
    $region13: #{_fused_time_call.1} parent=1 // pred_fallthru
      _
    // Predicated region
    $region14: #{_fused_time_call.1} parent=1 // pred_check
      _
    $region15: #{_fused_time_call.1} parent=1 // pred_check_branch
      %25 = sbr.rel (0) target = $region17
    $region16: #{_fused_time_call.1} parent=1 // pred_region
      _
    $region17: #{_fused_time_call.1} parent=1 // pred_fallthru
      _
    // Predicated region
    $region18: #{_fused_time_call.1} parent=1 // pred_check
      _
    $region19: #{_fused_time_call.1} parent=1 // pred_check_branch
      %27 = sbr.rel (0) target = $region21
    $region20: #{_fused_time_call.1} parent=1 // pred_region
      _
    $region21: #{_fused_time_call.1} parent=1 // pred_fallthru
      _
    // Predicated region
    $region22: #{_fused_time_call.1} parent=1 // pred_check
      _
    $region23: #{_fused_time_call.1} parent=1 // pred_check_branch
      %29 = sbr.rel (0) target = $region25
    $region24: #{_fused_time_call.1} parent=1 // pred_region
      _
    $region25: #{_fused_time_call.1} parent=1 // pred_fallthru
      _
    // Predicated region
    $region26: #{_fused_time_call.1} parent=1 // pred_check
      _
    $region27: #{_fused_time_call.1} parent=1 // pred_check_branch
      %31 = sbr.rel (0) target = $region29
    $region28: #{_fused_time_call.1} parent=1 // pred_region
      _
    $region29: #{_fused_time_call.1} parent=1 // pred_fallthru
      _
    // Predicated region
    $region30: #{_fused_time_call.1} parent=1 // pred_check
      _
    $region31: #{_fused_time_call.1} parent=1 // pred_check_branch
      %33 = sbr.rel (0) target = $region33
    $region32: #{_fused_time_call.1} parent=1 // pred_region
      _
    $region33: #{_fused_time_call.1} parent=1 // pred_fallthru
      _
    // Predicated region
    $region34: #{_fused_time_call.1} parent=1 // pred_check
      _
    $region35: #{_fused_time_call.1} parent=1 // pred_check_branch
      %35 = sbr.rel (0) target = $region37
    $region36: #{_fused_time_call.1} parent=1 // pred_region
      _
    $region37: #{_fused_time_call.1} parent=1 // pred_fallthru
      _
    %v37 = vld [vmem:[%s0] sm:$0xff]
    %v38 = vld [vmem:[%s1] sm:$0x1]
    %40 = vset.pattern.permute.xlu0 0
    %41 = vperm.xlu0 %40, %v37
    %v42 = vpop.permute.xlu0 %41
    %v45 = vlaneseq
    %v46 = vshrl.u32 %v45, 7
    %v47 = vsub.s32 0, %v46
    %v48 = vrot.slane %v38, %v47
    %v50 = vmul.f32 %v42, %v48
    %v51 = vld [vmem:[%s2] sm:$0x1]
    %v52 = vand.u32 2147483647, %v50
    %vm53 = vcmp.le.f32.partialorder %v52, 0.7853982
    %vm54 = vcmp.lt.s32.totalorder %v50, 0
    %v55 = vand.u32 %v50, 2139095040
    %v56 = vshrl.u32 %v55, 23
    %v57 = vsub.s32 %v56, 127
    %v58 = vand.u32 2147483647, %v50
    %v59 = vand.u32 %v58, 8388607
    %v60 = vor.u32 %v59, 8388608
    %v61 = vsub.s32 0, %v60
    %v62 = vadd.s32 %v57, 1
    %vm63 = vcmp.gt.s32.totalorder %v62, 0
    %v64 = vsel %vm63, %v62, 0
    %v65 = vshrl.u32 %v64, 5
    %v66 = vand.u32 %v64, 31
    %v67 = vsub.s32 32, %v66
    %v68 = vshrl.u32 683565275, %v67
    %v69 = vshll.u32 683565275, %v66
    %v70 = vshrl.u32 2475754826, %v67
    %v71 = vor.u32 %v69, %v70
    %v72 = vshll.u32 2475754826, %v66
    %v73 = vshrl.u32 2131351028, %v67
    %v74 = vor.u32 %v72, %v73
    %v75 = vshll.u32 2131351028, %v66
    %v76 = vshrl.u32 2102212464, %v67
    %v77 = vor.u32 %v75, %v76
    %v78 = vshll.u32 2102212464, %v66
    %v79 = vshrl.u32 920167782, %v67
    %v80 = vor.u32 %v78, %v79
    %v81 = vshll.u32 920167782, %v66
    %v82 = vshrl.u32 1326507024, %v67
    %v83 = vor.u32 %v81, %v82
    %vm84 = vcmp.lt.s32.totalorder %v65, 1
    %vm85 = vcmp.lt.s32.totalorder %v65, 2
    %vm86 = vcmp.lt.s32.totalorder %v65, 3
    %vm87 = vcmp.lt.s32.totalorder %v65, 4
    %v88 = vsel %vm84, %v68, %v71
    %v89 = vsel %vm87, %v77, 2102212464
    %v90 = vsel %vm86, %v74, %v89
    %v91 = vsel %vm85, %v88, %v90
    %v92 = vsel %vm84, %v71, %v74
    %v93 = vsel %vm87, %v80, 920167782
    %v94 = vsel %vm86, %v77, %v93
    %v95 = vsel %vm85, %v92, %v94
    %v96 = vsel %vm84, %v74, %v77
    %v97 = vsel %vm87, %v83, 1326507024
    %v98 = vsel %vm86, %v80, %v97
    %v99 = vsel %vm85, %v96, %v98
    %v100 = vshll.u32 %v60, 8
    %v101 = vmul.u32.u64.compose %v100, %v99
    %v102 = vextract.low.u32 %v101
    %v103 = vextract.high.u32 %v101
    %v104 = vmul.u32.u64.compose %v100, %v95
    %v105 = vextract.low.u32 %v104
    %v106 = vextract.high.u32 %v104
    %v107 = vmul.u32 %v100, %v91
    %v108 = vadd.s32 %v103, %v105
    %vm109 = vc.u32 %v103, %v105
    %v110 = vadd.s32 %v106, 1
    %v111 = vsel %vm109, %v110, %v106
    %v112 = vadd.s32 %v107, %v111
    %v113 = vadd.s32 %v112, 536870912
    %v114 = vshrl.u32 %v113, 30
    %v115 = vshll.u32 %v114, 30
    %v116 = vsub.s32 %v112, %v115
    %vm117 = vcmp.lt.s32.totalorder %v116, 0
    %v118 = vsub.s32 0, %v116
    %v119 = vsel %vm117, %v118, %v116
    %v120 = vclz %v119
    %v121 = vsub.s32 %v120, 2
    %vm122 = vcmp.gt.s32.totalorder 0, %v121
    %v123 = vsel %vm122, 0, %v121
    %v124 = vsub.s32 32, %v123
    %v125 = vshll.u32 %v116, %v123
    %v126 = vshrl.u32 %v108, %v124
    %v127 = vor.u32 %v125, %v126
    %v128 = vsub.s32 4294967266, %v123
    %v129 = vadd.s32 %v128, 127
    %v130 = vshll.u32 %v129, 23
    %v131 = vor.u32 4788187, %v130
    %v132 = vand.u32 2147483647, %v131
    %v134 = vcvt.s32.f32 %v127
    %v135 = vmul.f32 %v134, %v132
    %v136 = vxor.u32 %v135, 2147483648
    %v137 = vsel %vm54, %v136, %v135
    %v138 = vsub.s32 4, %v114
    %v139 = vsel %vm54, %v138, %v114
    %v140 = vsel %vm53, %v50, %v137
    %v141 = vsel %vm53, 0, %v139
    %v142 = vcosq.f32.pop %v140
    %v143 = vsinq.f32.pop %v140
    %vm144 = vweird.f32 %v50
    %v145 = vadd.s32 %v141, 3
    %v146 = vand.u32 %v145, 3
    %vm147 = vcmp.lt.s32.totalorder %v146, 2
    %vm148 = vcmp.eq.s32.totalorder %v146, 0
    %v149 = vxor.u32 %v143, 2147483648
    %v150 = vsel %vm148, %v142, %v149
    %vm151 = vcmp.eq.s32.totalorder %v146, 2
    %v152 = vxor.u32 %v142, 2147483648
    %v153 = vsel %vm151, %v152, %v143
    %v154 = vsel %vm147, %v150, %v153
    %v155 = vsel %vm144, nan, %v154
    %v157 = vlaneseq
    %v158 = vshrl.u32 %v157, 7
    %v159 = vsub.s32 0, %v158
    %v160 = vrot.slane %v51, %v159
    %v162 = vmul.f32 %v160, %v155
    %v163 = vsub.f32 1.0, %v51
    %v164 = vand.u32 2147483647, %v50
    %vm165 = vcmp.le.f32.partialorder %v164, 0.7853982
    %vm166 = vcmp.lt.s32.totalorder %v50, 0
    %v167 = vand.u32 %v50, 2139095040
    %v168 = vshrl.u32 %v167, 23
    %v169 = vsub.s32 %v168, 127
    %v170 = vand.u32 2147483647, %v50
    %v171 = vand.u32 %v170, 8388607
    %v172 = vor.u32 %v171, 8388608
    %v173 = vsub.s32 0, %v172
    %v174 = vadd.s32 %v169, 1
    %vm175 = vcmp.gt.s32.totalorder %v174, 0
    %v176 = vsel %vm175, %v174, 0
    %v177 = vshrl.u32 %v176, 5
    %v178 = vand.u32 %v176, 31
    %v179 = vsub.s32 32, %v178
    %v180 = vshrl.u32 683565275, %v179
    %v181 = vshll.u32 683565275, %v178
    %v182 = vshrl.u32 2475754826, %v179
    %v183 = vor.u32 %v181, %v182
    %v184 = vshll.u32 2475754826, %v178
    %v185 = vshrl.u32 2131351028, %v179
    %v186 = vor.u32 %v184, %v185
    %v187 = vshll.u32 2131351028, %v178
    %v188 = vshrl.u32 2102212464, %v179
    %v189 = vor.u32 %v187, %v188
    %v190 = vshll.u32 2102212464, %v178
    %v191 = vshrl.u32 920167782, %v179
    %v192 = vor.u32 %v190, %v191
    %v193 = vshll.u32 920167782, %v178
    %v194 = vshrl.u32 1326507024, %v179
    %v195 = vor.u32 %v193, %v194
    %vm196 = vcmp.lt.s32.totalorder %v177, 1
    %vm197 = vcmp.lt.s32.totalorder %v177, 2
    %vm198 = vcmp.lt.s32.totalorder %v177, 3
    %vm199 = vcmp.lt.s32.totalorder %v177, 4
    %v200 = vsel %vm196, %v180, %v183
    %v201 = vsel %vm199, %v189, 2102212464
    %v202 = vsel %vm198, %v186, %v201
    %v203 = vsel %vm197, %v200, %v202
    %v204 = vsel %vm196, %v183, %v186
    %v205 = vsel %vm199, %v192, 920167782
    %v206 = vsel %vm198, %v189, %v205
    %v207 = vsel %vm197, %v204, %v206
    %v208 = vsel %vm196, %v186, %v189
    %v209 = vsel %vm199, %v195, 1326507024
    %v210 = vsel %vm198, %v192, %v209
    %v211 = vsel %vm197, %v208, %v210
    %v212 = vshll.u32 %v172, 8
    %v213 = vmul.u32.u64.compose %v212, %v211
    %v214 = vextract.low.u32 %v213
    %v215 = vextract.high.u32 %v213
    %v216 = vmul.u32.u64.compose %v212, %v207
    %v217 = vextract.low.u32 %v216
    %v218 = vextract.high.u32 %v216
    %v219 = vmul.u32 %v212, %v203
    %v220 = vadd.s32 %v215, %v217
    %vm221 = vc.u32 %v215, %v217
    %v222 = vadd.s32 %v218, 1
    %v223 = vsel %vm221, %v222, %v218
    %v224 = vadd.s32 %v219, %v223
    %v225 = vadd.s32 %v224, 536870912
    %v226 = vshrl.u32 %v225, 30
    %v227 = vshll.u32 %v226, 30
    %v228 = vsub.s32 %v224, %v227
    %vm229 = vcmp.lt.s32.totalorder %v228, 0
    %v230 = vsub.s32 0, %v228
    %v231 = vsel %vm229, %v230, %v228
    %v232 = vclz %v231
    %v233 = vsub.s32 %v232, 2
    %vm234 = vcmp.gt.s32.totalorder 0, %v233
    %v235 = vsel %vm234, 0, %v233
    %v236 = vsub.s32 32, %v235
    %v237 = vshll.u32 %v228, %v235
    %v238 = vshrl.u32 %v220, %v236
    %v239 = vor.u32 %v237, %v238
    %v240 = vsub.s32 4294967266, %v235
    %v241 = vadd.s32 %v240, 127
    %v242 = vshll.u32 %v241, 23
    %v243 = vor.u32 4788187, %v242
    %v244 = vand.u32 2147483647, %v243
    %v246 = vcvt.s32.f32 %v239
    %v247 = vmul.f32 %v246, %v244
    %v248 = vxor.u32 %v247, 2147483648
    %v249 = vsel %vm166, %v248, %v247
    %v250 = vsub.s32 4, %v226
    %v251 = vsel %vm166, %v250, %v226
    %v252 = vsel %vm165, %v50, %v249
    %v253 = vsel %vm165, 0, %v251
    %v254 = vcosq.f32.pop %v252
    %v255 = vsinq.f32.pop %v252
    %vm256 = vweird.f32 %v50
    %v257 = vand.u32 %v253, 3
    %vm258 = vcmp.lt.s32.totalorder %v257, 2
    %vm259 = vcmp.eq.s32.totalorder %v257, 0
    %v260 = vxor.u32 %v255, 2147483648
    %v261 = vsel %vm259, %v254, %v260
    %vm262 = vcmp.eq.s32.totalorder %v257, 2
    %v263 = vxor.u32 %v254, 2147483648
    %v264 = vsel %vm262, %v263, %v255
    %v265 = vsel %vm258, %v261, %v264
    %v266 = vsel %vm256, nan, %v265
    %v268 = vlaneseq
    %v269 = vshrl.u32 %v268, 7
    %v270 = vsub.s32 0, %v269
    %v271 = vrot.slane %v163, %v270
    %v273 = vmul.f32 %v271, %v266
    %v274 = vadd.f32 %v162, %v273
    %v275 = vpack.c.bf16 %v274, %v274
    %v276 = vld [vmem:[%s3] sm:$0xf]
    %v277 = vld [vmem:[%s3 + $0x4] sm:$0xf]
    %v278 = vld [vmem:[%s3 + $0x8] sm:$0xf]
    %v279 = vld [vmem:[%s3 + $0xc] sm:$0xf]
    %v280 = vld [vmem:[%s4] sm:$0x1]
    %v282 = vlaneseq
    %v283 = vshrl.u32 %v282, 7
    %v284 = vsub.s32 0, %v283
    %v285 = vrot.slane %v280, %v284
    %v291 = vunpack.c.l.b16 %v276
    %v292 = vunpack.c.l.b16 %v277
    %v293 = vunpack.c.l.b16 %v278
    %v294 = vunpack.c.l.b16 %v279
    %v295 = vpack.c.b16 %v292, %v291
    %v296 = vpack.c.b16 %v294, %v293
    %vm299 = vcmask 261120
    %v301 = vsel %vm299, %v275, 0
    %303 = vmatprep.subr.bf16.mxu0 0
    %304 = vmatpush1.bf16.msra.mxu0 %v295
    %305 = vmatprep.subr.bf16.mxu0 0
    %306 = vmatpush1.bf16.msra.mxu0 %v296
    %307 = vmatprep.subr.bf16.mxu0 0
    %308 = vmatpush1.bf16.msra.mxu0 0
    %309 = vmatprep.subr.bf16.mxu0 0
    %310 = vmatpush1.bf16.msra.mxu0 0
    %311 = vmatprep.subr.bf16.mxu0 0
    %312 = vmatpush1.bf16.msra.mxu0 0
    %313 = vmatprep.subr.bf16.mxu0 0
    %314 = vmatpush1.bf16.msra.mxu0 0
    %315 = vmatprep.subr.bf16.mxu0 0
    %316 = vmatpush1.bf16.msra.mxu0 0
    %317 = vmatprep.subr.bf16.mxu0 0
    %318 = vmatpush1.bf16.msra.mxu0 0
    %319 = vmatprep.subr.bf16.mxu0 0
    %320 = vmatpush1.bf16.msra.mxu0 0
    %321 = vmatprep.subr.bf16.mxu0 0
    %322 = vmatpush1.bf16.msra.mxu0 0
    %323 = vmatprep.subr.bf16.mxu0 0
    %324 = vmatpush1.bf16.msra.mxu0 0
    %325 = vmatprep.subr.bf16.mxu0 0
    %326 = vmatpush1.bf16.msra.mxu0 0
    %327 = vmatprep.subr.bf16.mxu0 0
    %328 = vmatpush1.bf16.msra.mxu0 0
    %329 = vmatprep.subr.bf16.mxu0 0
    %330 = vmatpush1.bf16.msra.mxu0 0
    %331 = vmatprep.subr.bf16.mxu0 0
    %332 = vmatpush1.bf16.msra.mxu0 0
    %333 = vmatprep.subr.bf16.mxu0 0
    %334 = vmatpush1.bf16.msra.mxu0 0
    %335 = vmatprep.mubr.bf16.mxu0 0
    %336 = vmatmul.mubr.bf16.gmra.mrb[0].mxu0 %v301
    %v337 = vpop.f32.mrb[0].mxu0
    %v338 = vadd.f32 %v285, %v337
    %v339 = vpop.f32.mrb[0].mxu0
    %v340 = vpop.f32.mrb[0].mxu0
    %v341 = vpop.f32.mrb[0].mxu0
    %342 = vdwg.mxu0
    %v343 = vmul.f32 %v338, 0.5
    %v344 = vmul.f32 %v338, 0.70710677
    %v345 = vand.u32 2147483647, %v344
    %v346 = vmul.f32 %v345, 0.3275911
    %v347 = vadd.f32 %v346, 1.0
    %v348 = vrcp.pop %v347
    %v349 = vmul.f32 %v348, 1.0614054
    %v350 = vadd.f32 %v349, -1.4531521
    %v351 = vmul.f32 %v348, %v350
    %v352 = vadd.f32 %v351, 1.4214138
    %v353 = vmul.f32 %v348, %v352
    %v354 = vadd.f32 %v353, -0.28449672
    %v355 = vmul.f32 %v348, %v354
    %v356 = vadd.f32 %v355, 0.2548296
    %v357 = vmul.f32 %v348, %v356
    %v358 = vsub.f32 0.0, %v345
    %v359 = vmul.f32 %v358, %v345
    %v360 = vmul.f32 %v359, 1.442695
    %v361 = vpow.pop %v360
    %v362 = vmul.f32 %v357, %v361
    %v363 = vsub.f32 1.0, %v362
    %vm364 = vcmp.lt.f32.partialorder %v344, 0.0
    %v365 = vsub.f32 0.0, %v363
    %v366 = vsel %vm364, %v365, %v363
    %v367 = vadd.f32 %v366, 1.0
    %v368 = vmul.f32 %v343, %v367
    %v369 = vpack.c.bf16 %v368, %v368
    %v370 = vld [vmem:[%s5] sm:$0xf]
    %v371 = vld [vmem:[%s5 + $0x4] sm:$0xf]
    %v372 = vld [vmem:[%s5 + $0x8] sm:$0xf]
    %v373 = vld [vmem:[%s5 + $0xc] sm:$0xf]
    %v374 = vld [vmem:[%s5 + $0x10] sm:$0xf]
    %v375 = vld [vmem:[%s5 + $0x14] sm:$0xf]
    %v376 = vld [vmem:[%s5 + $0x18] sm:$0xf]
    %v377 = vld [vmem:[%s5 + $0x1c] sm:$0xf]
    %v378 = vld [vmem:[%s5 + $0x20] sm:$0xf]
    %v379 = vld [vmem:[%s5 + $0x24] sm:$0xf]
    %v380 = vld [vmem:[%s5 + $0x28] sm:$0xf]
    %v381 = vld [vmem:[%s5 + $0x2c] sm:$0xf]
    %v382 = vld [vmem:[%s5 + $0x30] sm:$0xf]
    %v383 = vld [vmem:[%s5 + $0x34] sm:$0xf]
    %v384 = vld [vmem:[%s5 + $0x38] sm:$0xf]
    %v385 = vld [vmem:[%s5 + $0x3c] sm:$0xf]
    %v386 = vld [vmem:[%s6] sm:$0x1]
    %v388 = vlaneseq
    %v389 = vshrl.u32 %v388, 7
    %v390 = vsub.s32 0, %v389
    %v391 = vrot.slane %v386, %v390
    %v409 = vunpack.c.l.b16 %v370
    %v410 = vunpack.c.l.b16 %v371
    %v411 = vunpack.c.l.b16 %v372
    %v412 = vunpack.c.l.b16 %v373
    %v413 = vunpack.c.l.b16 %v374
    %v414 = vunpack.c.l.b16 %v375
    %v415 = vunpack.c.l.b16 %v376
    %v416 = vunpack.c.l.b16 %v377
    %v417 = vunpack.c.l.b16 %v378
    %v418 = vunpack.c.l.b16 %v379
    %v419 = vunpack.c.l.b16 %v380
    %v420 = vunpack.c.l.b16 %v381
    %v421 = vunpack.c.l.b16 %v382
    %v422 = vunpack.c.l.b16 %v383
    %v423 = vunpack.c.l.b16 %v384
    %v424 = vunpack.c.l.b16 %v385
    %v425 = vpack.c.b16 %v410, %v409
    %v426 = vpack.c.b16 %v412, %v411
    %v427 = vpack.c.b16 %v414, %v413
    %v428 = vpack.c.b16 %v416, %v415
    %v429 = vpack.c.b16 %v418, %v417
    %v430 = vpack.c.b16 %v420, %v419
    %v431 = vpack.c.b16 %v422, %v421
    %v432 = vpack.c.b16 %v424, %v423
    %441 = vmatprep.subr.bf16.mxu0 0
    %442 = vmatpush1.bf16.msra.mxu0 %v425
    %443 = vmatprep.subr.bf16.mxu0 0
    %444 = vmatpush1.bf16.msra.mxu0 %v426
    %445 = vmatprep.subr.bf16.mxu0 0
    %446 = vmatpush1.bf16.msra.mxu0 %v427
    %447 = vmatprep.subr.bf16.mxu0 0
    %448 = vmatpush1.bf16.msra.mxu0 %v428
    %449 = vmatprep.subr.bf16.mxu0 0
    %450 = vmatpush1.bf16.msra.mxu0 %v429
    %451 = vmatprep.subr.bf16.mxu0 0
    %452 = vmatpush1.bf16.msra.mxu0 %v430
    %453 = vmatprep.subr.bf16.mxu0 0
    %454 = vmatpush1.bf16.msra.mxu0 %v431
    %455 = vmatprep.subr.bf16.mxu0 0
    %456 = vmatpush1.bf16.msra.mxu0 %v432
    %457 = vmatprep.subr.bf16.mxu0 0
    %458 = vmatpush1.bf16.msra.mxu0 0
    %459 = vmatprep.subr.bf16.mxu0 0
    %460 = vmatpush1.bf16.msra.mxu0 0
    %461 = vmatprep.subr.bf16.mxu0 0
    %462 = vmatpush1.bf16.msra.mxu0 0
    %463 = vmatprep.subr.bf16.mxu0 0
    %464 = vmatpush1.bf16.msra.mxu0 0
    %465 = vmatprep.subr.bf16.mxu0 0
    %466 = vmatpush1.bf16.msra.mxu0 0
    %467 = vmatprep.subr.bf16.mxu0 0
    %468 = vmatpush1.bf16.msra.mxu0 0
    %469 = vmatprep.subr.bf16.mxu0 0
    %470 = vmatpush1.bf16.msra.mxu0 0
    %471 = vmatprep.subr.bf16.mxu0 0
    %472 = vmatpush1.bf16.msra.mxu0 0
    %473 = vmatprep.mubr.bf16.mxu0 0
    %474 = vmatmul.mubr.bf16.gmra.mrb[0].mxu0 %v369
    %v475 = vpop.f32.mrb[0].mxu0
    %v476 = vadd.f32 %v391, %v475
    %v477 = vpop.f32.mrb[0].mxu0
    %v478 = vpop.f32.mrb[0].mxu0
    %v479 = vpop.f32.mrb[0].mxu0
    %480 = vdwg.mxu0
    %481 = vst [vmem:[#allocation2] sm:$0xff] %v476
    %v482 = vsub.f32 0.0, %v476
    %v483 = vmul.f32 %v482, 1.442695
    %v484 = vpow.pop %v483
    %v485 = vadd.f32 %v484, 1.0
    %v486 = vrcp.pop %v485
    %v487 = vmul.f32 1.0, %v486
    %v488 = vmul.f32 %v476, %v487
    %v489 = vpack.c.bf16 %v488, %v488
    %v490 = vld [vmem:[%s7] sm:$0xff]
    %v491 = vld [vmem:[%s7 + $0x8] sm:$0xff]
    %v492 = vld [vmem:[%s7 + $0x10] sm:$0xff]
    %v493 = vld [vmem:[%s7 + $0x18] sm:$0xff]
    %v494 = vld [vmem:[%s7 + $0x20] sm:$0xff]
    %v495 = vld [vmem:[%s7 + $0x28] sm:$0xff]
    %v496 = vld [vmem:[%s7 + $0x30] sm:$0xff]
    %v497 = vld [vmem:[%s7 + $0x38] sm:$0xff]
    %v498 = vld [vmem:[%s7 + $0x40] sm:$0xff]
    %v499 = vld [vmem:[%s7 + $0x48] sm:$0xff]
    %v500 = vld [vmem:[%s7 + $0x50] sm:$0xff]
    %v501 = vld [vmem:[%s7 + $0x58] sm:$0xff]
    %v502 = vld [vmem:[%s7 + $0x60] sm:$0xff]
    %v503 = vld [vmem:[%s7 + $0x68] sm:$0xff]
    %v504 = vld [vmem:[%s7 + $0x70] sm:$0xff]
    %v505 = vld [vmem:[%s7 + $0x78] sm:$0xff]
    %v506 = vld [vmem:[%s7 + $0x80] sm:$0xff]
    %v507 = vld [vmem:[%s7 + $0x88] sm:$0xff]
    %v508 = vld [vmem:[%s7 + $0x90] sm:$0xff]
    %v509 = vld [vmem:[%s7 + $0x98] sm:$0xff]
    %v510 = vld [vmem:[%s7 + $0xa0] sm:$0xff]
    %v511 = vld [vmem:[%s7 + $0xa8] sm:$0xff]
    %v512 = vld [vmem:[%s7 + $0xb0] sm:$0xff]
    %v513 = vld [vmem:[%s7 + $0xb8] sm:$0xff]
    %v514 = vld [vmem:[%s7 + $0xc0] sm:$0xff]
    %v515 = vld [vmem:[%s7 + $0xc8] sm:$0xff]
    %v516 = vld [vmem:[%s7 + $0xd0] sm:$0xff]
    %v517 = vld [vmem:[%s7 + $0xd8] sm:$0xff]
    %v518 = vld [vmem:[%s7 + $0xe0] sm:$0xff]
    %v519 = vld [vmem:[%s7 + $0xe8] sm:$0xff]
    %v520 = vld [vmem:[%s7 + $0xf0] sm:$0xff]
    %v521 = vld [vmem:[%s7 + $0xf8] sm:$0xff]
    %v522 = vld [vmem:[%s7 + $0x100] sm:$0xff]
    %v523 = vld [vmem:[%s7 + $0x108] sm:$0xff]
    %v524 = vld [vmem:[%s7 + $0x110] sm:$0xff]
    %v525 = vld [vmem:[%s7 + $0x118] sm:$0xff]
    %v526 = vld [vmem:[%s7 + $0x120] sm:$0xff]
    %v527 = vld [vmem:[%s7 + $0x128] sm:$0xff]
    %v528 = vld [vmem:[%s7 + $0x130] sm:$0xff]
    %v529 = vld [vmem:[%s7 + $0x138] sm:$0xff]
    %v530 = vld [vmem:[%s7 + $0x140] sm:$0xff]
    %v531 = vld [vmem:[%s7 + $0x148] sm:$0xff]
    %v532 = vld [vmem:[%s7 + $0x150] sm:$0xff]
    %v533 = vld [vmem:[%s7 + $0x158] sm:$0xff]
    %v534 = vld [vmem:[%s7 + $0x160] sm:$0xff]
    %v535 = vld [vmem:[%s7 + $0x168] sm:$0xff]
    %v536 = vld [vmem:[%s7 + $0x170] sm:$0xff]
    %v537 = vld [vmem:[%s7 + $0x178] sm:$0xff]
    %v538 = vld [vmem:[%s7 + $0x180] sm:$0xff]
    %v539 = vld [vmem:[%s7 + $0x188] sm:$0xff]
    %v540 = vld [vmem:[%s7 + $0x190] sm:$0xff]
    %v541 = vld [vmem:[%s7 + $0x198] sm:$0xff]
    %v542 = vld [vmem:[%s7 + $0x1a0] sm:$0xff]
    %v543 = vld [vmem:[%s7 + $0x1a8] sm:$0xff]
    %v544 = vld [vmem:[%s7 + $0x1b0] sm:$0xff]
    %v545 = vld [vmem:[%s7 + $0x1b8] sm:$0xff]
    %v546 = vld [vmem:[%s7 + $0x1c0] sm:$0xff]
    %v547 = vld [vmem:[%s7 + $0x1c8] sm:$0xff]
    %v548 = vld [vmem:[%s7 + $0x1d0] sm:$0xff]
    %v549 = vld [vmem:[%s7 + $0x1d8] sm:$0xff]
    %v550 = vld [vmem:[%s7 + $0x1e0] sm:$0xff]
    %v551 = vld [vmem:[%s7 + $0x1e8] sm:$0xff]
    %v552 = vld [vmem:[%s7 + $0x1f0] sm:$0xff]
    %v553 = vld [vmem:[%s7 + $0x1f8] sm:$0xff]
    %v554 = vld [vmem:[%s8] sm:$0xff]
    %v556 = vlaneseq
    %v557 = vshrl.u32 %v556, 7
    %v558 = vsub.s32 0, %v557
    %v559 = vrot.slane %v554, %v558
    %v560 = vlaneseq
    %v561 = vshrl.u32 %v560, 7
    %v562 = vsub.s32 1, %v561
    %v563 = vrot.slane %v554, %v562
    %v564 = vlaneseq
    %v565 = vshrl.u32 %v564, 7
    %v566 = vsub.s32 2, %v565
    %v567 = vrot.slane %v554, %v566
    %v568 = vlaneseq
    %v569 = vshrl.u32 %v568, 7
    %v570 = vsub.s32 3, %v569
    %v571 = vrot.slane %v554, %v570
    %v572 = vlaneseq
    %v573 = vshrl.u32 %v572, 7
    %v574 = vsub.s32 4, %v573
    %v575 = vrot.slane %v554, %v574
    %v576 = vlaneseq
    %v577 = vshrl.u32 %v576, 7
    %v578 = vsub.s32 5, %v577
    %v579 = vrot.slane %v554, %v578
    %v580 = vlaneseq
    %v581 = vshrl.u32 %v580, 7
    %v582 = vsub.s32 6, %v581
    %v583 = vrot.slane %v554, %v582
    %v584 = vlaneseq
    %v585 = vshrl.u32 %v584, 7
    %v586 = vsub.s32 7, %v585
    %v587 = vrot.slane %v554, %v586
    %v660 = vunpack.c.l.b16 %v490
    %v661 = vunpack.c.h.b16 %v490
    %v662 = vunpack.c.l.b16 %v491
    %v663 = vunpack.c.h.b16 %v491
    %v664 = vunpack.c.l.b16 %v492
    %v665 = vunpack.c.h.b16 %v492
    %v666 = vunpack.c.l.b16 %v493
    %v667 = vunpack.c.h.b16 %v493
    %v668 = vunpack.c.l.b16 %v494
    %v669 = vunpack.c.h.b16 %v494
    %v670 = vunpack.c.l.b16 %v495
    %v671 = vunpack.c.h.b16 %v495
    %v672 = vunpack.c.l.b16 %v496
    %v673 = vunpack.c.h.b16 %v496
    %v674 = vunpack.c.l.b16 %v497
    %v675 = vunpack.c.h.b16 %v497
    %v676 = vunpack.c.l.b16 %v498
    %v677 = vunpack.c.h.b16 %v498
    %v678 = vunpack.c.l.b16 %v499
    %v679 = vunpack.c.h.b16 %v499
    %v680 = vunpack.c.l.b16 %v500
    %v681 = vunpack.c.h.b16 %v500
    %v682 = vunpack.c.l.b16 %v501
    %v683 = vunpack.c.h.b16 %v501
    %v684 = vunpack.c.l.b16 %v502
    %v685 = vunpack.c.h.b16 %v502
    %v686 = vunpack.c.l.b16 %v503
    %v687 = vunpack.c.h.b16 %v503
    %v688 = vunpack.c.l.b16 %v504
    %v689 = vunpack.c.h.b16 %v504
    %v690 = vunpack.c.l.b16 %v505
    %v691 = vunpack.c.h.b16 %v505
    %v692 = vunpack.c.l.b16 %v506
    %v693 = vunpack.c.h.b16 %v506
    %v694 = vunpack.c.l.b16 %v507
    %v695 = vunpack.c.h.b16 %v507
    %v696 = vunpack.c.l.b16 %v508
    %v697 = vunpack.c.h.b16 %v508
    %v698 = vunpack.c.l.b16 %v509
    %v699 = vunpack.c.h.b16 %v509
    %v700 = vunpack.c.l.b16 %v510
    %v701 = vunpack.c.h.b16 %v510
    %v702 = vunpack.c.l.b16 %v511
    %v703 = vunpack.c.h.b16 %v511
    %v704 = vunpack.c.l.b16 %v512
    %v705 = vunpack.c.h.b16 %v512
    %v706 = vunpack.c.l.b16 %v513
    %v707 = vunpack.c.h.b16 %v513
    %v708 = vunpack.c.l.b16 %v514
    %v709 = vunpack.c.h.b16 %v514
    %v710 = vunpack.c.l.b16 %v515
    %v711 = vunpack.c.h.b16 %v515
    %v712 = vunpack.c.l.b16 %v516
    %v713 = vunpack.c.h.b16 %v516
    %v714 = vunpack.c.l.b16 %v517
    %v715 = vunpack.c.h.b16 %v517
    %v716 = vunpack.c.l.b16 %v518
    %v717 = vunpack.c.h.b16 %v518
    %v718 = vunpack.c.l.b16 %v519
    %v719 = vunpack.c.h.b16 %v519
    %v720 = vunpack.c.l.b16 %v520
    %v721 = vunpack.c.h.b16 %v520
    %v722 = vunpack.c.l.b16 %v521
    %v723 = vunpack.c.h.b16 %v521
    %v724 = vunpack.c.l.b16 %v522
    %v725 = vunpack.c.h.b16 %v522
    %v726 = vunpack.c.l.b16 %v523
    %v727 = vunpack.c.h.b16 %v523
    %v728 = vunpack.c.l.b16 %v524
    %v729 = vunpack.c.h.b16 %v524
    %v730 = vunpack.c.l.b16 %v525
    %v731 = vunpack.c.h.b16 %v525
    %v732 = vunpack.c.l.b16 %v526
    %v733 = vunpack.c.h.b16 %v526
    %v734 = vunpack.c.l.b16 %v527
    %v735 = vunpack.c.h.b16 %v527
    %v736 = vunpack.c.l.b16 %v528
    %v737 = vunpack.c.h.b16 %v528
    %v738 = vunpack.c.l.b16 %v529
    %v739 = vunpack.c.h.b16 %v529
    %v740 = vunpack.c.l.b16 %v530
    %v741 = vunpack.c.h.b16 %v530
    %v742 = vunpack.c.l.b16 %v531
    %v743 = vunpack.c.h.b16 %v531
    %v744 = vunpack.c.l.b16 %v532
    %v745 = vunpack.c.h.b16 %v532
    %v746 = vunpack.c.l.b16 %v533
    %v747 = vunpack.c.h.b16 %v533
    %v748 = vunpack.c.l.b16 %v534
    %v749 = vunpack.c.h.b16 %v534
    %v750 = vunpack.c.l.b16 %v535
    %v751 = vunpack.c.h.b16 %v535
    %v752 = vunpack.c.l.b16 %v536
    %v753 = vunpack.c.h.b16 %v536
    %v754 = vunpack.c.l.b16 %v537
    %v755 = vunpack.c.h.b16 %v537
    %v756 = vunpack.c.l.b16 %v538
    %v757 = vunpack.c.h.b16 %v538
    %v758 = vunpack.c.l.b16 %v539
    %v759 = vunpack.c.h.b16 %v539
    %v760 = vunpack.c.l.b16 %v540
    %v761 = vunpack.c.h.b16 %v540
    %v762 = vunpack.c.l.b16 %v541
    %v763 = vunpack.c.h.b16 %v541
    %v764 = vunpack.c.l.b16 %v542
    %v765 = vunpack.c.h.b16 %v542
    %v766 = vunpack.c.l.b16 %v543
    %v767 = vunpack.c.h.b16 %v543
    %v768 = vunpack.c.l.b16 %v544
    %v769 = vunpack.c.h.b16 %v544
    %v770 = vunpack.c.l.b16 %v545
    %v771 = vunpack.c.h.b16 %v545
    %v772 = vunpack.c.l.b16 %v546
    %v773 = vunpack.c.h.b16 %v546
    %v774 = vunpack.c.l.b16 %v547
    %v775 = vunpack.c.h.b16 %v547
    %v776 = vunpack.c.l.b16 %v548
    %v777 = vunpack.c.h.b16 %v548
    %v778 = vunpack.c.l.b16 %v549
    %v779 = vunpack.c.h.b16 %v549
    %v780 = vunpack.c.l.b16 %v550
    %v781 = vunpack.c.h.b16 %v550
    %v782 = vunpack.c.l.b16 %v551
    %v783 = vunpack.c.h.b16 %v551
    %v784 = vunpack.c.l.b16 %v552
    %v785 = vunpack.c.h.b16 %v552
    %v786 = vunpack.c.l.b16 %v553
    %v787 = vunpack.c.h.b16 %v553
    %v788 = vpack.c.b16 %v668, %v660
    %v789 = vpack.c.b16 %v669, %v661
    %v790 = vpack.c.b16 %v670, %v662
    %v791 = vpack.c.b16 %v671, %v663
    %v792 = vpack.c.b16 %v672, %v664
    %v793 = vpack.c.b16 %v673, %v665
    %v794 = vpack.c.b16 %v674, %v666
    %v795 = vpack.c.b16 %v675, %v667
    %v796 = vpack.c.b16 %v684, %v676
    %v797 = vpack.c.b16 %v685, %v677
    %v798 = vpack.c.b16 %v686, %v678
    %v799 = vpack.c.b16 %v687, %v679
    %v800 = vpack.c.b16 %v688, %v680
    %v801 = vpack.c.b16 %v689, %v681
    %v802 = vpack.c.b16 %v690, %v682
    %v803 = vpack.c.b16 %v691, %v683
    %v804 = vpack.c.b16 %v700, %v692
    %v805 = vpack.c.b16 %v701, %v693
    %v806 = vpack.c.b16 %v702, %v694
    %v807 = vpack.c.b16 %v703, %v695
    %v808 = vpack.c.b16 %v704, %v696
    %v809 = vpack.c.b16 %v705, %v697
    %v810 = vpack.c.b16 %v706, %v698
    %v811 = vpack.c.b16 %v707, %v699
    %v812 = vpack.c.b16 %v716, %v708
    %v813 = vpack.c.b16 %v717, %v709
    %v814 = vpack.c.b16 %v718, %v710
    %v815 = vpack.c.b16 %v719, %v711
    %v816 = vpack.c.b16 %v720, %v712
    %v817 = vpack.c.b16 %v721, %v713
    %v818 = vpack.c.b16 %v722, %v714
    %v819 = vpack.c.b16 %v723, %v715
    %v820 = vpack.c.b16 %v732, %v724
    %v821 = vpack.c.b16 %v733, %v725
    %v822 = vpack.c.b16 %v734, %v726
    %v823 = vpack.c.b16 %v735, %v727
    %v824 = vpack.c.b16 %v736, %v728
    %v825 = vpack.c.b16 %v737, %v729
    %v826 = vpack.c.b16 %v738, %v730
    %v827 = vpack.c.b16 %v739, %v731
    %v828 = vpack.c.b16 %v748, %v740
    %v829 = vpack.c.b16 %v749, %v741
    %v830 = vpack.c.b16 %v750, %v742
    %v831 = vpack.c.b16 %v751, %v743
    %v832 = vpack.c.b16 %v752, %v744
    %v833 = vpack.c.b16 %v753, %v745
    %v834 = vpack.c.b16 %v754, %v746
    %v835 = vpack.c.b16 %v755, %v747
    %v836 = vpack.c.b16 %v764, %v756
    %v837 = vpack.c.b16 %v765, %v757
    %v838 = vpack.c.b16 %v766, %v758
    %v839 = vpack.c.b16 %v767, %v759
    %v840 = vpack.c.b16 %v768, %v760
    %v841 = vpack.c.b16 %v769, %v761
    %v842 = vpack.c.b16 %v770, %v762
    %v843 = vpack.c.b16 %v771, %v763
    %v844 = vpack.c.b16 %v780, %v772
    %v845 = vpack.c.b16 %v781, %v773
    %v846 = vpack.c.b16 %v782, %v774
    %v847 = vpack.c.b16 %v783, %v775
    %v848 = vpack.c.b16 %v784, %v776
    %v849 = vpack.c.b16 %v785, %v777
    %v850 = vpack.c.b16 %v786, %v778
    %v851 = vpack.c.b16 %v787, %v779
    %916 = vmatprep.subr.bf16.mxu0 %v789
    %917 = vmatpush1.bf16.msra.mxu0 %v788
    %918 = vmatprep.subr.bf16.mxu0 %v797
    %919 = vmatpush1.bf16.msra.mxu0 %v796
    %920 = vmatprep.subr.bf16.mxu0 %v805
    %921 = vmatpush1.bf16.msra.mxu0 %v804
    %922 = vmatprep.subr.bf16.mxu0 %v813
    %923 = vmatpush1.bf16.msra.mxu0 %v812
    %924 = vmatprep.subr.bf16.mxu0 %v821
    %925 = vmatpush1.bf16.msra.mxu0 %v820
    %926 = vmatprep.subr.bf16.mxu0 %v829
    %927 = vmatpush1.bf16.msra.mxu0 %v828
    %928 = vmatprep.subr.bf16.mxu0 %v837
    %929 = vmatpush1.bf16.msra.mxu0 %v836
    %930 = vmatprep.subr.bf16.mxu0 %v845
    %931 = vmatpush1.bf16.msra.mxu0 %v844
    %932 = vmatprep.subr.bf16.mxu0 0
    %933 = vmatpush1.bf16.msra.mxu0 0
    %934 = vmatprep.subr.bf16.mxu0 0
    %935 = vmatpush1.bf16.msra.mxu0 0
    %936 = vmatprep.subr.bf16.mxu0 0
    %937 = vmatpush1.bf16.msra.mxu0 0
    %938 = vmatprep.subr.bf16.mxu0 0
    %939 = vmatpush1.bf16.msra.mxu0 0
    %940 = vmatprep.subr.bf16.mxu0 0
    %941 = vmatpush1.bf16.msra.mxu0 0
    %942 = vmatprep.subr.bf16.mxu0 0
    %943 = vmatpush1.bf16.msra.mxu0 0
    %944 = vmatprep.subr.bf16.mxu0 0
    %945 = vmatpush1.bf16.msra.mxu0 0
    %946 = vmatprep.subr.bf16.mxu0 0
    %947 = vmatpush1.bf16.msra.mxu0 0
    %948 = vmatprep.mubr.bf16.mxu0 0
    %949 = vmatmul.mubr.bf16.gmra.mrb[0].mxu0 %v489
    %v950 = vpop.f32.mrb[0].mxu0
    %v951 = vadd.f32 %v559, %v950
    %v952 = vpop.f32.mrb[0].mxu0
    %v953 = vadd.f32 %v563, %v952
    %v954 = vpop.f32.mrb[0].mxu0
    %v955 = vpop.f32.mrb[0].mxu0
    %956 = vdwg.mxu0
    %957 = vmatprep.subr.bf16.mxu0 %v791
    %958 = vmatpush1.bf16.msra.mxu0 %v790
    %959 = vmatprep.subr.bf16.mxu0 %v799
    %960 = vmatpush1.bf16.msra.mxu0 %v798
    %961 = vmatprep.subr.bf16.mxu0 %v807
    %962 = vmatpush1.bf16.msra.mxu0 %v806
    %963 = vmatprep.subr.bf16.mxu0 %v815
    %964 = vmatpush1.bf16.msra.mxu0 %v814
    %965 = vmatprep.subr.bf16.mxu0 %v823
    %966 = vmatpush1.bf16.msra.mxu0 %v822
    %967 = vmatprep.subr.bf16.mxu0 %v831
    %968 = vmatpush1.bf16.msra.mxu0 %v830
    %969 = vmatprep.subr.bf16.mxu0 %v839
    %970 = vmatpush1.bf16.msra.mxu0 %v838
    %971 = vmatprep.subr.bf16.mxu0 %v847
    %972 = vmatpush1.bf16.msra.mxu0 %v846
    %973 = vmatprep.subr.bf16.mxu0 0
    %974 = vmatpush1.bf16.msra.mxu0 0
    %975 = vmatprep.subr.bf16.mxu0 0
    %976 = vmatpush1.bf16.msra.mxu0 0
    %977 = vmatprep.subr.bf16.mxu0 0
    %978 = vmatpush1.bf16.msra.mxu0 0
    %979 = vmatprep.subr.bf16.mxu0 0
    %980 = vmatpush1.bf16.msra.mxu0 0
    %981 = vmatprep.subr.bf16.mxu0 0
    %982 = vmatpush1.bf16.msra.mxu0 0
    %983 = vmatprep.subr.bf16.mxu0 0
    %984 = vmatpush1.bf16.msra.mxu0 0
    %985 = vmatprep.subr.bf16.mxu0 0
    %986 = vmatpush1.bf16.msra.mxu0 0
    %987 = vmatprep.subr.bf16.mxu0 0
    %988 = vmatpush1.bf16.msra.mxu0 0
    %989 = vmatprep.mubr.bf16.mxu0 0
    %990 = vmatmul.mubr.bf16.gmra.mrb[0].mxu0 %v489
    %v991 = vpop.f32.mrb[0].mxu0
    %v992 = vadd.f32 %v567, %v991
    %v993 = vpop.f32.mrb[0].mxu0
    %v994 = vadd.f32 %v571, %v993
    %v995 = vpop.f32.mrb[0].mxu0
    %v996 = vpop.f32.mrb[0].mxu0
    %997 = vdwg.mxu0
    %998 = vmatprep.subr.bf16.mxu0 %v793
    %999 = vmatpush1.bf16.msra.mxu0 %v792
    %1000 = vmatprep.subr.bf16.mxu0 %v801
    %1001 = vmatpush1.bf16.msra.mxu0 %v800
    %1002 = vmatprep.subr.bf16.mxu0 %v809
    %1003 = vmatpush1.bf16.msra.mxu0 %v808
    %1004 = vmatprep.subr.bf16.mxu0 %v817
    %1005 = vmatpush1.bf16.msra.mxu0 %v816
    %1006 = vmatprep.subr.bf16.mxu0 %v825
    %1007 = vmatpush1.bf16.msra.mxu0 %v824
    %1008 = vmatprep.subr.bf16.mxu0 %v833
    %1009 = vmatpush1.bf16.msra.mxu0 %v832
    %1010 = vmatprep.subr.bf16.mxu0 %v841
    %1011 = vmatpush1.bf16.msra.mxu0 %v840
    %1012 = vmatprep.subr.bf16.mxu0 %v849
    %1013 = vmatpush1.bf16.msra.mxu0 %v848
    %1014 = vmatprep.subr.bf16.mxu0 0
    %1015 = vmatpush1.bf16.msra.mxu0 0
    %1016 = vmatprep.subr.bf16.mxu0 0
    %1017 = vmatpush1.bf16.msra.mxu0 0
    %1018 = vmatprep.subr.bf16.mxu0 0
    %1019 = vmatpush1.bf16.msra.mxu0 0
    %1020 = vmatprep.subr.bf16.mxu0 0
    %1021 = vmatpush1.bf16.msra.mxu0 0
    %1022 = vmatprep.subr.bf16.mxu0 0
    %1023 = vmatpush1.bf16.msra.mxu0 0
    %1024 = vmatprep.subr.bf16.mxu0 0
    %1025 = vmatpush1.bf16.msra.mxu0 0
    %1026 = vmatprep.subr.bf16.mxu0 0
    %1027 = vmatpush1.bf16.msra.mxu0 0
    %1028 = vmatprep.subr.bf16.mxu0 0
    %1029 = vmatpush1.bf16.msra.mxu0 0
    %1030 = vmatprep.mubr.bf16.mxu0 0
    %1031 = vmatmul.mubr.bf16.gmra.mrb[0].mxu0 %v489
    %v1032 = vpop.f32.mrb[0].mxu0
    %v1033 = vadd.f32 %v575, %v1032
    %v1034 = vpop.f32.mrb[0].mxu0
    %v1035 = vadd.f32 %v579, %v1034
    %v1036 = vpop.f32.mrb[0].mxu0
    %v1037 = vpop.f32.mrb[0].mxu0
    %1038 = vdwg.mxu0
    %1039 = vmatprep.subr.bf16.mxu0 %v795
    %1040 = vmatpush1.bf16.msra.mxu0 %v794
    %1041 = vmatprep.subr.bf16.mxu0 %v803
    %1042 = vmatpush1.bf16.msra.mxu0 %v802
    %1043 = vmatprep.subr.bf16.mxu0 %v811
    %1044 = vmatpush1.bf16.msra.mxu0 %v810
    %1045 = vmatprep.subr.bf16.mxu0 %v819
    %1046 = vmatpush1.bf16.msra.mxu0 %v818
    %1047 = vmatprep.subr.bf16.mxu0 %v827
    %1048 = vmatpush1.bf16.msra.mxu0 %v826
    %1049 = vmatprep.subr.bf16.mxu0 %v835
    %1050 = vmatpush1.bf16.msra.mxu0 %v834
    %1051 = vmatprep.subr.bf16.mxu0 %v843
    %1052 = vmatpush1.bf16.msra.mxu0 %v842
    %1053 = vmatprep.subr.bf16.mxu0 %v851
    %1054 = vmatpush1.bf16.msra.mxu0 %v850
    %1055 = vmatprep.subr.bf16.mxu0 0
    %1056 = vmatpush1.bf16.msra.mxu0 0
    %1057 = vmatprep.subr.bf16.mxu0 0
    %1058 = vmatpush1.bf16.msra.mxu0 0
    %1059 = vmatprep.subr.bf16.mxu0 0
    %1060 = vmatpush1.bf16.msra.mxu0 0
    %1061 = vmatprep.subr.bf16.mxu0 0
    %1062 = vmatpush1.bf16.msra.mxu0 0
    %1063 = vmatprep.subr.bf16.mxu0 0
    %1064 = vmatpush1.bf16.msra.mxu0 0
    %1065 = vmatprep.subr.bf16.mxu0 0
    %1066 = vmatpush1.bf16.msra.mxu0 0
    %1067 = vmatprep.subr.bf16.mxu0 0
    %1068 = vmatpush1.bf16.msra.mxu0 0
    %1069 = vmatprep.subr.bf16.mxu0 0
    %1070 = vmatpush1.bf16.msra.mxu0 0
    %1071 = vmatprep.mubr.bf16.mxu0 0
    %1072 = vmatmul.mubr.bf16.gmra.mrb[0].mxu0 %v489
    %v1073 = vpop.f32.mrb[0].mxu0
    %v1074 = vadd.f32 %v583, %v1073
    %v1075 = vpop.f32.mrb[0].mxu0
    %v1076 = vadd.f32 %v587, %v1075
    %v1077 = vpop.f32.mrb[0].mxu0
    %v1078 = vpop.f32.mrb[0].mxu0
    %1079 = vdwg.mxu0
    %1080 = vst [vmem:[#allocation4] sm:$0xff] %v951
    %1081 = vst [vmem:[#allocation4 + $0x8] sm:$0xff] %v953
    %1082 = vst [vmem:[#allocation4 + $0x10] sm:$0xff] %v992
    %1083 = vst [vmem:[#allocation4 + $0x18] sm:$0xff] %v994
    %1084 = vst [vmem:[#allocation4 + $0x20] sm:$0xff] %v1033
    %1085 = vst [vmem:[#allocation4 + $0x28] sm:$0xff] %v1035
    %1086 = vst [vmem:[#allocation4 + $0x30] sm:$0xff] %v1074
    %vm1087 = vcmask 523264
    %1088 = vst.msk [vmem:[#allocation4 + $0x38] sm:$0xff] %vm1087, %v1076
    // Predicated region
    $region38: #{_fused_time_call.1} parent=1 // pred_check
      _
    $region39: #{_fused_time_call.1} parent=1 // pred_check_branch
      %1090 = sbr.rel (0) target = $region41
    $region40: #{_fused_time_call.1} parent=1 // pred_region
      %s1092 = ssub.s32 128, 128
      %1093 = vsyncadd [#allocation3], %s1092
      %s1095 = sshll.u32 [#allocation2], 4
      %s1096 = int_to_ptr.vmem [resolvable:$true] %s1095
      %1098 = dma.vmem_to_hbm [thread:$0]  %s1096, 128, %s9, [#allocation3]
    $region41: #{_fused_time_call.1} parent=1 // pred_fallthru
      _
    // Predicated region
    $region42: #{_fused_time_call.1} parent=1 // pred_check
      _
    $region43: #{_fused_time_call.1} parent=1 // pred_check_branch
      %1100 = sbr.rel (0) target = $region45
    $region44: #{_fused_time_call.1} parent=1 // pred_region
      %s1102 = ssub.s32 1024, 1024
      %1103 = vsyncadd [#allocation5], %s1102
      %s1105 = sshll.u32 [#allocation4], 4
      %s1106 = int_to_ptr.vmem [resolvable:$true] %s1105
      %1108 = dma.vmem_to_hbm [thread:$0]  %s1106, 1024, %s10, [#allocation5]
    $region45: #{_fused_time_call.1} parent=1 // pred_fallthru
      _
    // Predicated region
    $region46: #{_fused_time_call.1} parent=1 // pred_check
      _
    $region47: #{_fused_time_call.1} parent=1 // pred_check_branch
      %1110 = sbr.rel (0) target = $region49
    $region48: #{_fused_time_call.1} parent=1 // pred_region
      %1111 = dma.done [#allocation3], 128
    $region49: #{_fused_time_call.1} parent=1 // pred_fallthru
      _
    // Predicated region
    $region50: #{_fused_time_call.1} parent=1 // pred_check
      _
    $region51: #{_fused_time_call.1} parent=1 // pred_check_branch
      %1113 = sbr.rel (0) target = $region53
    $region52: #{_fused_time_call.1} parent=1 // pred_region
      %1114 = dma.done [#allocation5], 1024
    $region53: #{_fused_time_call.1} parent=1 // pred_fallthru
      _
    %1115 = vsyncpa [#allocation3], 1
    %1116 = vsyncpa [#allocation5], 1

</llo_original>
